<compile_context>
chip_gen: v6e
topology: v6e:2x2x1
jax: 0.10.0
libtpu: 0.0.40
codegen_flags: <defaults>
</compile_context>

<pallas_src>
import functools
from typing import NamedTuple

import jax
import jax.numpy as jnp
from jax.experimental import pallas as pl
from jax.experimental.pallas import tpu as pltpu

LANE = 128
SUBLANE = 8

# Matmul-weight storage dtype. bf16 halves weight DMA and uses the native MXU path on
# v6e/v7x; set to jnp.float32 to recover 1e-5 agreement with the f32 reference.
WEIGHT_DTYPE = jnp.bfloat16


def _round_up(x, m):
    return ((x + m - 1) // m) * m


class PackMeta(NamedTuple):
    obs_dim: int
    act_dim: int
    flatten_out: int
    hidden: int
    actor_out: int
    critic_out: int
    Xp: int   # lane-padded width of the [feat | past_action] block
    Hp: int   # lane-padded hidden-state width
    Op: int   # lane-padded output-head width
    Bp: int   # sublane-padded batch


# ------------------------------- fused kernel --------------------------------
def _fused_policy_kernel(obs_ref, actf_ref, h_ref, c_ref, mask_ref,
                         w1_ref, b1_ref, w_ref, b_ref, wout_ref, bout_ref,
                         out_ref, h_new_ref, c_new_ref, *, hidden):
    f32 = jnp.float32
    Hp = h_ref.shape[-1]
    H = hidden

    # --- MLP layer 1 (ReLU); layer 2 is folded into the gate matmul at pack time ---
    h1 = jnp.dot(obs_ref[...].astype(WEIGHT_DTYPE), w1_ref[...],
                 preferred_element_type=f32) + b1_ref[...]
    h1 = jnp.maximum(h1, 0.0)
    # past_action lives in the (otherwise zero) lanes [flatten_out, flatten_out+act_dim)
    # of the same Xp-wide block, so a single add replaces the old 3-way concat.
    x_feat = h1 + actf_ref[...]

    # --- masked recurrent state (mask pre-broadcast to (Bp, Hp): pure VPU mul) ---
    h = h_ref[...] * mask_ref[...]
    c = c_ref[...] * mask_ref[...]

    # --- single fused LSTM gate matmul on [feat+action | h] --------------------
    # Gate columns in natural (i|f|g|o) order, width 4*hidden (no per-gate padding).
    x = jnp.concatenate([x_feat, h], axis=-1).astype(WEIGHT_DTYPE)
    gates = jnp.dot(x, w_ref[...], preferred_element_type=f32) + b_ref[...]

    if 2 * H == Hp:
        # hidden == Hp/2 (e.g. 64): keep everything 128-lane dense.
        left = gates[:, :2 * H]                       # [ i | f ]
        right = gates[:, 2 * H:]                      # [ g | o ]
        sig_left = jax.nn.sigmoid(left)               # [ sig_i | sig_f ]
        lane = jax.lax.broadcasted_iota(jnp.int32, right.shape, 1)
        act_right = jnp.where(lane < H, jnp.tanh(right), jax.nn.sigmoid(right))  # [tanh_g | sig_o]
        ig = sig_left * act_right                     # lanes[0:H] = sig_i*tanh_g
        # half-swaps run on the otherwise-idle XLU; they align sig_f / sig_o with lanes[0:H].
        c_new = pltpu.roll(sig_left, H, axis=1) * c + ig
        h_new = pltpu.roll(act_right, H, axis=1) * jnp.tanh(c_new)
        # lanes [H:Hp] of h_new/c_new hold garbage; w_out pad rows are zero and the wrapper
        # slices [:, :hidden], so it never escapes.
    else:
        # generic fallback (lane-aligned when hidden % 128 == 0).
        i_g = jax.nn.sigmoid(gates[:, 0 * H:1 * H])
        f_g = jax.nn.sigmoid(gates[:, 1 * H:2 * H])
        g_g = jnp.tanh(gates[:, 2 * H:3 * H])
        o_g = jax.nn.sigmoid(gates[:, 3 * H:4 * H])
        c_n = f_g * c[:, :H] + i_g * g_g
        h_n = o_g * jnp.tanh(c_n)
        pad = ((0, 0), (0, Hp - H))
        c_new = jnp.pad(c_n, pad)
        h_new = jnp.pad(h_n, pad)

    # --- output head (lane-dense Op-wide slab; sliced in the wrapper) ----------
    out_ref[...] = (jnp.dot(h_new.astype(WEIGHT_DTYPE), wout_ref[...],
                            preferred_element_type=f32) + bout_ref[...])
    h_new_ref[...] = h_new
    c_new_ref[...] = c_new


# --------------------------- one-time parameter packing ----------------------
def pack_policy_params(params, batch_size):
    """Pack + fuse both branches' params into the padded kernel layout.

    Runs ONCE (outside the per-step jit) so the padded weights are materialized a single
    time instead of being rebuilt by XLA pad/concat/stack ops on every policy step.
    """
    pa, pc = params["actor"], params["critic"]
    hidden = pa["w_hh"].shape[0]
    act_dim = pa["w_ih_a"].shape[0]
    flatten_out = pa["w2"].shape[0]
    obs_dim = pa["w1"].shape[0]
    actor_out = pa["w_out"].shape[1]
    critic_out = pc["w_out"].shape[1]

    Hp = _round_up(hidden, LANE)
    Xp = _round_up(flatten_out + act_dim, LANE)
    Op = _round_up(max(actor_out, critic_out), LANE)
    Bp = _round_up(batch_size, SUBLANE)
    G = 4 * hidden
    f32 = jnp.float32

    def one(p, out_dim):
        # Fold MLP layer 2 into the gate matmul:
        #   feat @ w_ih_f + b_ih == h1 @ (w2 @ w_ih_f) + (b2 @ w_ih_f + b_ih)
        w2f = p["w2"].astype(f32) @ p["w_ih_f"].astype(f32)                    # (F, 4H)
        w_x = jnp.zeros((Xp, G), f32)
        w_x = w_x.at[:flatten_out].set(w2f)
        w_x = w_x.at[flatten_out:flatten_out + act_dim].set(p["w_ih_a"])       # action rows
        w_h = jnp.zeros((Hp, G), f32).at[:hidden].set(p["w_hh"])
        w = jnp.concatenate([w_x, w_h], axis=0)                                # (Xp+Hp, 4H)
        b = p["b_ih"] + p["b_hh"] + p["b2"].astype(f32) @ p["w_ih_f"].astype(f32)
        w1 = jnp.pad(p["w1"], ((0, 0), (0, Xp - flatten_out)))
        b1 = jnp.pad(p["b1"], ((0, 0), (0, Xp - flatten_out)))
        w_out = jnp.pad(p["w_out"], ((0, Hp - hidden), (0, Op - out_dim)))
        b_out = jnp.pad(p["b_out"], ((0, 0), (0, Op - out_dim)))
        return dict(
            w1=w1.astype(WEIGHT_DTYPE),
            b1=jnp.broadcast_to(b1, (Bp, Xp)).astype(f32),   # pre-broadcast: whole-vreg adds
            w=w.astype(WEIGHT_DTYPE),
            b=jnp.broadcast_to(b, (Bp, G)).astype(f32),
            w_out=w_out.astype(WEIGHT_DTYPE),
            b_out=jnp.broadcast_to(b_out, (Bp, Op)).astype(f32),
        )

    a, c = one(pa, actor_out), one(pc, critic_out)
    packed = {k: jnp.stack([a[k], c[k]], axis=0) for k in a}   # branch 0 = actor, 1 = critic
    meta = PackMeta(obs_dim, act_dim, flatten_out, hidden, actor_out, critic_out,
                    Xp, Hp, Op, Bp)
    return packed, meta


# ------------------------------- policy forward ------------------------------
def policy_forward(packed, inputs, rnn_hxs, masks, *, meta):
    """Mirror of Policy.forward: returns (value, actor_logits, new rnn_hxs)."""
    B = inputs["past_action"].shape[0]
    if B > meta.Bp:
        raise ValueError(f"batch {B} exceeds packed batch {meta.Bp}; re-run pack_policy_params")
    F, A, H = meta.flatten_out, meta.act_dim, meta.hidden
    Xp, Hp, Op, Bp = meta.Xp, meta.Hp, meta.Op, meta.Bp
    G = 4 * H
    Kp = Xp + Hp

    def pad_rows(x, cols=None):
        cols = x.shape[1] if cols is None else cols
        return jnp.pad(x.astype(jnp.float32),
                       ((0, Bp - x.shape[0]), (0, cols - x.shape[1])))

    obs2 = jnp.stack([pad_rows(inputs["actor"]), pad_rows(inputs["critic"])], axis=0)
    # Place past_action into lanes [F, F+A) of the Xp-wide feature block.
    act_feat = jnp.pad(inputs["past_action"].astype(jnp.float32),
                       ((0, Bp - B), (F, Xp - F - A)))
    h2 = jnp.stack([pad_rows(rnn_hxs["actor"][0], Hp),
                    pad_rows(rnn_hxs["critic"][0], Hp)], axis=0)
    c2 = jnp.stack([pad_rows(rnn_hxs["actor"][1], Hp),
                    pad_rows(rnn_hxs["critic"][1], Hp)], axis=0)
    mask_bh = pad_rows(jnp.broadcast_to(masks.astype(jnp.float32), (B, H)), Hp)

    # ---- BlockSpecs: grid=(2,) over branches; leading None dim is squeezed ----
    def per_branch(*dims):
        return pl.BlockSpec((None,) + dims, lambda g, _d=len(dims): (g,) + (0,) * _d)

    def shared(*dims):
        return pl.BlockSpec(dims, lambda g, _d=len(dims): (0,) * _d)

    in_specs = [
        per_branch(Bp, meta.obs_dim),   # obs
        shared(Bp, Xp),                 # past_action packed into feature lanes (shared)
        per_branch(Bp, Hp),             # h
        per_branch(Bp, Hp),             # c
        shared(Bp, Hp),                 # mask broadcast to hidden width (shared)
        per_branch(meta.obs_dim, Xp),   # w1
        per_branch(Bp, Xp),             # b1 (pre-broadcast)
        per_branch(Kp, G),              # fused LSTM weight [w2@w_ih_f ; w_ih_a ; w_hh]
        per_branch(Bp, G),              # fused LSTM bias (b_ih + b_hh + b2@w_ih_f)
        per_branch(Hp, Op),             # output head W
        per_branch(Bp, Op),             # output head b
    ]
    out_specs = (per_branch(Bp, Op), per_branch(Bp, Hp), per_branch(Bp, Hp))
    out_shape = (jax.ShapeDtypeStruct((2, Bp, Op), jnp.float32),
                 jax.ShapeDtypeStruct((2, Bp, Hp), jnp.float32),
                 jax.ShapeDtypeStruct((2, Bp, Hp), jnp.float32))

    wbytes = jnp.dtype(WEIGHT_DTYPE).itemsize
    flops = 2 * 2 * Bp * (meta.obs_dim * Xp + Kp * G + Hp * Op)
    transcendentals = 2 * Bp * 6 * Hp
    bytes_accessed = (2 * wbytes * (meta.obs_dim * Xp + Kp * G + Hp * Op)
                      + 2 * 4 * Bp * (Xp + G + Op)
                      + 4 * Bp * (2 * meta.obs_dim + Xp + 5 * Hp)
                      + 4 * Bp * (2 * Op + 4 * Hp))
    cost = pl.CostEstimate(flops=int(flops), transcendentals=int(transcendentals),
                           bytes_accessed=int(bytes_accessed))

    fn = pl.pallas_call(
        functools.partial(_fused_policy_kernel, hidden=H),
        grid=(2,),                               # branch 0 = actor, 1 = critic
        out_shape=out_shape,
        in_specs=in_specs,
        out_specs=out_specs,
        # New h/c overwrite the (dead) padded h/c inputs: no extra HBM buffers per step.
        input_output_aliases={2: 1, 3: 2},
        compiler_params=pltpu.CompilerParams(dimension_semantics=("parallel",)),
        cost_estimate=cost,
    )
    out2, h_new2, c_new2 = fn(obs2, act_feat, h2, c2, mask_bh,
                              packed["w1"], packed["b1"], packed["w"], packed["b"],
                              packed["w_out"], packed["b_out"])

    logit = out2[0, :B, :meta.actor_out]
    value = out2[1, :B, :meta.critic_out]
    new_hxs = {"actor": (h_new2[0, :B, :H], c_new2[0, :B, :H]),
               "critic": (h_new2[1, :B, :H], c_new2[1, :B, :H])}
    return value, logit, new_hxs


# ----------------------------- reference (pure JAX, f32) ----------------------
def _basic_policy_ref(obs, action, h, c, masks, p):
    h1 = jnp.maximum(obs @ p["w1"] + p["b1"], 0.0)
    feat = h1 @ p["w2"] + p["b2"]
    h = h * masks
    c = c * masks
    gates = (action @ p["w_ih_a"] + feat @ p["w_ih_f"] + p["b_ih"]
             + h @ p["w_hh"] + p["b_hh"])
    H = h.shape[-1]
    i_g = jax.nn.sigmoid(gates[:, 0 * H:1 * H])
    f_g = jax.nn.sigmoid(gates[:, 1 * H:2 * H])
    g_g = jnp.tanh(gates[:, 2 * H:3 * H])
    o_g = jax.nn.sigmoid(gates[:, 3 * H:4 * H])
    c_new = f_g * c + i_g * g_g
    h_new = o_g * jnp.tanh(c_new)
    return h_new @ p["w_out"] + p["b_out"], h_new, c_new


# ----------------------------- parameter init --------------------------------
def init_basic_policy_params(key, obs_dim, act_dim, flatten_out, hidden, out_dim):
    ks = jax.random.split(key, 8)
    s = 0.1
    n = lambda k, shape: (jax.random.normal(k, shape, jnp.float32) * s)
    return dict(
        w1=n(ks[0], (obs_dim, flatten_out)),
        b1=jnp.zeros((1, flatten_out), jnp.float32),
        w2=n(ks[1], (flatten_out, flatten_out)),
        b2=jnp.zeros((1, flatten_out), jnp.float32),
        w_ih_a=n(ks[2], (act_dim, 4 * hidden)),
        w_ih_f=n(ks[3], (flatten_out, 4 * hidden)),
        b_ih=n(ks[4], (1, 4 * hidden)),
        w_hh=n(ks[5], (hidden, 4 * hidden)),
        b_hh=n(ks[6], (1, 4 * hidden)),
        w_out=n(ks[7], (hidden, out_dim)),
        b_out=jnp.zeros((1, out_dim), jnp.float32),
    )


if __name__ == "__main__":
    B = 8                 # batch
    OBS_DIM = 32          # flattened observation size per branch
    FLATTEN_OUT = 64      # option.feature_extract['flatten_out']
    HIDDEN = 64           # option.hidden_size
    ACT_DIM = 8           # obs_space['past_action'].shape[0]
    NVEC = (3, 4, 5)      # action_space.nvec -> actor logits = sum(NVEC)
    ACTOR_OUT = sum(NVEC)
    CRITIC_OUT = 1

    key = jax.random.PRNGKey(0)
    k_in, k_act, k_hx, k_pa, k_pc = jax.random.split(key, 5)

    params = {
        "actor": init_basic_policy_params(k_pa, OBS_DIM, ACT_DIM, FLATTEN_OUT, HIDDEN, ACTOR_OUT),
        "critic": init_basic_policy_params(k_pc, OBS_DIM, ACT_DIM, FLATTEN_OUT, HIDDEN, CRITIC_OUT),
    }

    ki = jax.random.split(k_in, 2)
    inputs = {
        "actor": jax.random.normal(ki[0], (B, OBS_DIM), jnp.float32),
        "critic": jax.random.normal(ki[1], (B, OBS_DIM), jnp.float32),
        "past_action": jax.random.normal(k_act, (B, ACT_DIM), jnp.float32),
    }
    kh = jax.random.split(k_hx, 4)
    rnn_hxs = {
        "actor": (jax.random.normal(kh[0], (B, HIDDEN), jnp.float32),
                  jax.random.normal(kh[1], (B, HIDDEN), jnp.float32)),
        "critic": (jax.random.normal(kh[2], (B, HIDDEN), jnp.float32),
                   jax.random.normal(kh[3], (B, HIDDEN), jnp.float32)),
    }
    masks = jnp.concatenate(
        [jnp.ones((B // 2, 1), jnp.float32), jnp.zeros((B - B // 2, 1), jnp.float32)], axis=0)

    # One-time packing, hoisted out of the per-step jitted path.
    packed, meta = pack_policy_params(params, batch_size=B)
    policy_fn = jax.jit(functools.partial(policy_forward, meta=meta))

    value, logit, new_hxs = policy_fn(packed, inputs, rnn_hxs, masks)
    jax.block_until_ready((value, logit, new_hxs))

    # correctness check against pure-f32 reference (bf16 weight storage -> looser tolerance)
    l_ref, ha_ref, ca_ref = _basic_policy_ref(
        inputs["actor"], inputs["past_action"], *rnn_hxs["actor"], masks, params["actor"])
    v_ref, hc_ref, cc_ref = _basic_policy_ref(
        inputs["critic"], inputs["past_action"], *rnn_hxs["critic"], masks, params["critic"])

    if jnp.dtype(WEIGHT_DTYPE) == jnp.dtype(jnp.bfloat16):
        TOL = dict(atol=3e-2, rtol=3e-2)
    else:
        TOL = dict(atol=1e-5, rtol=1e-5)

    assert value.shape == (B, CRITIC_OUT) and logit.shape == (B, ACTOR_OUT)
    assert jnp.allclose(value, v_ref, **TOL)
    assert jnp.allclose(logit, l_ref, **TOL)
    assert jnp.allclose(new_hxs["actor"][0], ha_ref, **TOL)
    assert jnp.allclose(new_hxs["actor"][1], ca_ref, **TOL)
    assert jnp.allclose(new_hxs["critic"][0], hc_ref, **TOL)
    assert jnp.allclose(new_hxs["critic"][1], cc_ref, **TOL)

    # second step reusing the packed params (no per-step repacking in the hot path)
    value2, logit2, new_hxs2 = policy_fn(packed, inputs, new_hxs, jnp.ones_like(masks))
    jax.block_until_ready((value2, logit2, new_hxs2))

    print("KERNEL_OK")
</pallas_src>

<mosaic_0001>
module attributes {stable_mosaic.version = 11 : i64} {
  func.func @_fused_policy_kernel(%arg0: i32, %arg1: memref<1x8x32xf32, #tpu.memory_space<vmem>>, %arg2: memref<8x128xf32, #tpu.memory_space<vmem>>, %arg3: memref<1x8x128xf32, #tpu.memory_space<vmem>>, %arg4: memref<1x8x128xf32, #tpu.memory_space<vmem>>, %arg5: memref<8x128xf32, #tpu.memory_space<vmem>>, %arg6: memref<1x32x128xbf16, #tpu.memory_space<vmem>>, %arg7: memref<1x8x128xf32, #tpu.memory_space<vmem>>, %arg8: memref<1x256x256xbf16, #tpu.memory_space<vmem>>, %arg9: memref<1x8x256xf32, #tpu.memory_space<vmem>>, %arg10: memref<1x128x128xbf16, #tpu.memory_space<vmem>>, %arg11: memref<1x8x128xf32, #tpu.memory_space<vmem>>, %arg12: memref<1x8x128xf32, #tpu.memory_space<vmem>>, %arg13: memref<1x8x128xf32, #tpu.memory_space<vmem>>, %arg14: memref<1x8x128xf32, #tpu.memory_space<vmem>>) attributes {dimension_semantics = [#tpu.dimension_semantics<parallel>], iteration_bounds = array<i64: 2>, scalar_prefetch = 0 : i64, scratch_operands = 0 : i64, tpu.core_type = #tpu.core_type<tc>, window_params = [{transform_indices = @transform_0, window_bounds = array<i64: 1, 8, 32>}, {pipeline_mode = #tpu.pipeline_mode<synchronous>, transform_indices = @transform_1, window_bounds = array<i64: 8, 128>}, {transform_indices = @transform_2, window_bounds = array<i64: 1, 8, 128>}, {transform_indices = @transform_3, window_bounds = array<i64: 1, 8, 128>}, {pipeline_mode = #tpu.pipeline_mode<synchronous>, transform_indices = @transform_4, window_bounds = array<i64: 8, 128>}, {transform_indices = @transform_5, window_bounds = array<i64: 1, 32, 128>}, {transform_indices = @transform_6, window_bounds = array<i64: 1, 8, 128>}, {transform_indices = @transform_7, window_bounds = array<i64: 1, 256, 256>}, {transform_indices = @transform_8, window_bounds = array<i64: 1, 8, 256>}, {transform_indices = @transform_9, window_bounds = array<i64: 1, 128, 128>}, {transform_indices = @transform_10, window_bounds = array<i64: 1, 8, 128>}, {transform_indices = @transform_11, window_bounds = array<i64: 1, 8, 128>}, {transform_indices = @transform_12, window_bounds = array<i64: 1, 8, 128>}, {transform_indices = @transform_13, window_bounds = array<i64: 1, 8, 128>}]} {
    %c0 = arith.constant 0 : index
    %c0_0 = arith.constant 0 : index
    %c0_1 = arith.constant 0 : index
    %0 = vector.load %arg1[%c0, %c0_0, %c0_1] : memref<1x8x32xf32, #tpu.memory_space<vmem>>, vector<1x8x32xf32>
    %1 = vector.shape_cast %0 : vector<1x8x32xf32> to vector<8x32xf32>
    %2 = arith.truncf %1 : vector<8x32xf32> to vector<8x32xbf16>
    %c0_2 = arith.constant 0 : index
    %c0_3 = arith.constant 0 : index
    %c0_4 = arith.constant 0 : index
    %3 = vector.load %arg6[%c0_2, %c0_3, %c0_4] : memref<1x32x128xbf16, #tpu.memory_space<vmem>>, vector<1x32x128xbf16>
    %4 = vector.shape_cast %3 : vector<1x32x128xbf16> to vector<32x128xbf16>
    %cst = arith.constant dense<0.000000e+00> : vector<8x128xf32>
    %5 = tpu.matmul %2, %4, %cst {dimension_numbers = #tpu.dot_dimension_numbers<[1], [0], [0], [1], [0, 0, 1, 1], [], []>} : vector<8x32xbf16>, vector<32x128xbf16>, vector<8x128xf32> -> vector<8x128xf32>
    %c0_5 = arith.constant 0 : index
    %c0_6 = arith.constant 0 : index
    %c0_7 = arith.constant 0 : index
    %6 = vector.load %arg7[%c0_5, %c0_6, %c0_7] : memref<1x8x128xf32, #tpu.memory_space<vmem>>, vector<1x8x128xf32>
    %7 = vector.shape_cast %6 : vector<1x8x128xf32> to vector<8x128xf32>
    %8 = arith.addf %5, %7 : vector<8x128xf32>
    %cst_8 = arith.constant 0.000000e+00 : f32
    %9 = vector.broadcast %cst_8 : f32 to vector<8x128xf32>
    %10 = arith.maximumf %8, %9 : vector<8x128xf32>
    %c0_9 = arith.constant 0 : index
    %c0_10 = arith.constant 0 : index
    %11 = vector.load %arg2[%c0_9, %c0_10] : memref<8x128xf32, #tpu.memory_space<vmem>>, vector<8x128xf32>
    %12 = arith.addf %10, %11 : vector<8x128xf32>
    %c0_11 = arith.constant 0 : index
    %c0_12 = arith.constant 0 : index
    %c0_13 = arith.constant 0 : index
    %13 = vector.load %arg3[%c0_11, %c0_12, %c0_13] : memref<1x8x128xf32, #tpu.memory_space<vmem>>, vector<1x8x128xf32>
    %14 = vector.shape_cast %13 : vector<1x8x128xf32> to vector<8x128xf32>
    %c0_14 = arith.constant 0 : index
    %c0_15 = arith.constant 0 : index
    %15 = vector.load %arg5[%c0_14, %c0_15] : memref<8x128xf32, #tpu.memory_space<vmem>>, vector<8x128xf32>
    %16 = arith.mulf %14, %15 : vector<8x128xf32>
    %c0_16 = arith.constant 0 : index
    %c0_17 = arith.constant 0 : index
    %c0_18 = arith.constant 0 : index
    %17 = vector.load %arg4[%c0_16, %c0_17, %c0_18] : memref<1x8x128xf32, #tpu.memory_space<vmem>>, vector<1x8x128xf32>
    %18 = vector.shape_cast %17 : vector<1x8x128xf32> to vector<8x128xf32>
    %c0_19 = arith.constant 0 : index
    %c0_20 = arith.constant 0 : index
    %19 = vector.load %arg5[%c0_19, %c0_20] : memref<8x128xf32, #tpu.memory_space<vmem>>, vector<8x128xf32>
    %20 = arith.mulf %18, %19 : vector<8x128xf32>
    %21 = tpu.concatenate %12, %16 in 1 : vector<8x128xf32>, vector<8x128xf32> -> vector<8x256xf32>
    %22 = arith.truncf %21 : vector<8x256xf32> to vector<8x256xbf16>
    %c0_21 = arith.constant 0 : index
    %c0_22 = arith.constant 0 : index
    %c0_23 = arith.constant 0 : index
    %23 = vector.load %arg8[%c0_21, %c0_22, %c0_23] : memref<1x256x256xbf16, #tpu.memory_space<vmem>>, vector<1x256x256xbf16>
    %24 = vector.shape_cast %23 : vector<1x256x256xbf16> to vector<256x256xbf16>
    %cst_24 = arith.constant dense<0.000000e+00> : vector<8x256xf32>
    %25 = tpu.matmul %22, %24, %cst_24 {dimension_numbers = #tpu.dot_dimension_numbers<[1], [0], [0], [1], [0, 0, 1, 1], [], []>} : vector<8x256xbf16>, vector<256x256xbf16>, vector<8x256xf32> -> vector<8x256xf32>
    %c0_25 = arith.constant 0 : index
    %c0_26 = arith.constant 0 : index
    %c0_27 = arith.constant 0 : index
    %26 = vector.load %arg9[%c0_25, %c0_26, %c0_27] : memref<1x8x256xf32, #tpu.memory_space<vmem>>, vector<1x8x256xf32>
    %27 = vector.shape_cast %26 : vector<1x8x256xf32> to vector<8x256xf32>
    %28 = arith.addf %25, %27 : vector<8x256xf32>
    %29 = vector.extract_strided_slice %28 {offsets = [0, 0], sizes = [8, 128], strides = [1, 1]} : vector<8x256xf32> to vector<8x128xf32>
    %30 = vector.extract_strided_slice %28 {offsets = [0, 128], sizes = [8, 128], strides = [1, 1]} : vector<8x256xf32> to vector<8x128xf32>
    %31 = arith.negf %29 : vector<8x128xf32>
    %32 = math.exp %31 : vector<8x128xf32>
    %cst_28 = arith.constant 1.000000e+00 : f32
    %33 = vector.broadcast %cst_28 : f32 to vector<8x128xf32>
    %34 = arith.addf %33, %32 : vector<8x128xf32>
    %35 = arith.divf %33, %34 : vector<8x128xf32>
    %36 = tpu.iota {dimensions = array<i32: 1>} : vector<8x128xi32>
    %c64_i32 = arith.constant 64 : i32
    %37 = vector.broadcast %c64_i32 : i32 to vector<8x128xi32>
    %38 = arith.cmpi slt, %36, %37 : vector<8x128xi32>
    %39 = math.tanh %30 : vector<8x128xf32>
    %40 = arith.negf %30 : vector<8x128xf32>
    %41 = math.exp %40 : vector<8x128xf32>
    %cst_29 = arith.constant 1.000000e+00 : f32
    %42 = vector.broadcast %cst_29 : f32 to vector<8x128xf32>
    %43 = arith.addf %42, %41 : vector<8x128xf32>
    %44 = arith.divf %42, %43 : vector<8x128xf32>
    %45 = arith.select %38, %39, %44 : vector<8x128xi1>, vector<8x128xf32>
    %46 = arith.mulf %35, %45 : vector<8x128xf32>
    %c64_i32_30 = arith.constant 64 : i32
    %47 = tpu.dynamic_rotate %35 by %c64_i32_30 dim 1 : vector<8x128xf32>, i32 -> vector<8x128xf32>
    %48 = arith.mulf %47, %20 : vector<8x128xf32>
    %49 = arith.addf %48, %46 : vector<8x128xf32>
    %c64_i32_31 = arith.constant 64 : i32
    %50 = tpu.dynamic_rotate %45 by %c64_i32_31 dim 1 : vector<8x128xf32>, i32 -> vector<8x128xf32>
    %51 = math.tanh %49 : vector<8x128xf32>
    %52 = arith.mulf %50, %51 : vector<8x128xf32>
    %53 = arith.truncf %52 : vector<8x128xf32> to vector<8x128xbf16>
    %c0_32 = arith.constant 0 : index
    %c0_33 = arith.constant 0 : index
    %c0_34 = arith.constant 0 : index
    %54 = vector.load %arg10[%c0_32, %c0_33, %c0_34] : memref<1x128x128xbf16, #tpu.memory_space<vmem>>, vector<1x128x128xbf16>
    %55 = vector.shape_cast %54 : vector<1x128x128xbf16> to vector<128x128xbf16>
    %cst_35 = arith.constant dense<0.000000e+00> : vector<8x128xf32>
    %56 = tpu.matmul %53, %55, %cst_35 {dimension_numbers = #tpu.dot_dimension_numbers<[1], [0], [0], [1], [0, 0, 1, 1], [], []>} : vector<8x128xbf16>, vector<128x128xbf16>, vector<8x128xf32> -> vector<8x128xf32>
    %c0_36 = arith.constant 0 : index
    %c0_37 = arith.constant 0 : index
    %c0_38 = arith.constant 0 : index
    %57 = vector.load %arg11[%c0_36, %c0_37, %c0_38] : memref<1x8x128xf32, #tpu.memory_space<vmem>>, vector<1x8x128xf32>
    %58 = vector.shape_cast %57 : vector<1x8x128xf32> to vector<8x128xf32>
    %59 = arith.addf %56, %58 : vector<8x128xf32>
    %c0_39 = arith.constant 0 : index
    %c0_40 = arith.constant 0 : index
    %c0_41 = arith.constant 0 : index
    %60 = vector.load %arg12[%c0_39, %c0_40, %c0_41] : memref<1x8x128xf32, #tpu.memory_space<vmem>>, vector<1x8x128xf32>
    %61 = vector.shape_cast %60 : vector<1x8x128xf32> to vector<8x128xf32>
    %62 = vector.shape_cast %59 : vector<8x128xf32> to vector<1x8x128xf32>
    tpu.vector_store %arg12[%c0_39, %c0_40, %c0_41], %62 {strides = array<i32>} : memref<1x8x128xf32, #tpu.memory_space<vmem>>, vector<1x8x128xf32>,
    %c0_42 = arith.constant 0 : index
    %c0_43 = arith.constant 0 : index
    %c0_44 = arith.constant 0 : index
    %63 = vector.load %arg13[%c0_42, %c0_43, %c0_44] : memref<1x8x128xf32, #tpu.memory_space<vmem>>, vector<1x8x128xf32>
    %64 = vector.shape_cast %63 : vector<1x8x128xf32> to vector<8x128xf32>
    %65 = vector.shape_cast %52 : vector<8x128xf32> to vector<1x8x128xf32>
    tpu.vector_store %arg13[%c0_42, %c0_43, %c0_44], %65 {strides = array<i32>} : memref<1x8x128xf32, #tpu.memory_space<vmem>>, vector<1x8x128xf32>,
    %c0_45 = arith.constant 0 : index
    %c0_46 = arith.constant 0 : index
    %c0_47 = arith.constant 0 : index
    %66 = vector.load %arg14[%c0_45, %c0_46, %c0_47] : memref<1x8x128xf32, #tpu.memory_space<vmem>>, vector<1x8x128xf32>
    %67 = vector.shape_cast %66 : vector<1x8x128xf32> to vector<8x128xf32>
    %68 = vector.shape_cast %49 : vector<8x128xf32> to vector<1x8x128xf32>
    tpu.vector_store %arg14[%c0_45, %c0_46, %c0_47], %68 {strides = array<i32>} : memref<1x8x128xf32, #tpu.memory_space<vmem>>, vector<1x8x128xf32>,
    return
  }
  func.func @transform_0(%arg0: i32) -> (i32, i32, i32) {
    %c0_i32 = arith.constant 0 : i32
    %c0_i32_0 = arith.constant 0 : i32
    %c0_i32_1 = arith.constant 0 : i32
    return %arg0, %c0_i32, %c0_i32_0 : i32, i32, i32
  }
  func.func @transform_1(%arg0: i32) -> (i32, i32) {
    %c0_i32 = arith.constant 0 : i32
    %c0_i32_0 = arith.constant 0 : i32
    %c0_i32_1 = arith.constant 0 : i32
    return %c0_i32, %c0_i32_0 : i32, i32
  }
  func.func @transform_2(%arg0: i32) -> (i32, i32, i32) {
    %c0_i32 = arith.constant 0 : i32
    %c0_i32_0 = arith.constant 0 : i32
    %c0_i32_1 = arith.constant 0 : i32
    return %arg0, %c0_i32, %c0_i32_0 : i32, i32, i32
  }
  func.func @transform_3(%arg0: i32) -> (i32, i32, i32) {
    %c0_i32 = arith.constant 0 : i32
    %c0_i32_0 = arith.constant 0 : i32
    %c0_i32_1 = arith.constant 0 : i32
    return %arg0, %c0_i32, %c0_i32_0 : i32, i32, i32
  }
  func.func @transform_4(%arg0: i32) -> (i32, i32) {
    %c0_i32 = arith.constant 0 : i32
    %c0_i32_0 = arith.constant 0 : i32
    %c0_i32_1 = arith.constant 0 : i32
    return %c0_i32, %c0_i32_0 : i32, i32
  }
  func.func @transform_5(%arg0: i32) -> (i32, i32, i32) {
    %c0_i32 = arith.constant 0 : i32
    %c0_i32_0 = arith.constant 0 : i32
    %c0_i32_1 = arith.constant 0 : i32
    return %arg0, %c0_i32, %c0_i32_0 : i32, i32, i32
  }
  func.func @transform_6(%arg0: i32) -> (i32, i32, i32) {
    %c0_i32 = arith.constant 0 : i32
    %c0_i32_0 = arith.constant 0 : i32
    %c0_i32_1 = arith.constant 0 : i32
    return %arg0, %c0_i32, %c0_i32_0 : i32, i32, i32
  }
  func.func @transform_7(%arg0: i32) -> (i32, i32, i32) {
    %c0_i32 = arith.constant 0 : i32
    %c0_i32_0 = arith.constant 0 : i32
    %c0_i32_1 = arith.constant 0 : i32
    return %arg0, %c0_i32, %c0_i32_0 : i32, i32, i32
  }
  func.func @transform_8(%arg0: i32) -> (i32, i32, i32) {
    %c0_i32 = arith.constant 0 : i32
    %c0_i32_0 = arith.constant 0 : i32
    %c0_i32_1 = arith.constant 0 : i32
    return %arg0, %c0_i32, %c0_i32_0 : i32, i32, i32
  }
  func.func @transform_9(%arg0: i32) -> (i32, i32, i32) {
    %c0_i32 = arith.constant 0 : i32
    %c0_i32_0 = arith.constant 0 : i32
    %c0_i32_1 = arith.constant 0 : i32
    return %arg0, %c0_i32, %c0_i32_0 : i32, i32, i32
  }
  func.func @transform_10(%arg0: i32) -> (i32, i32, i32) {
    %c0_i32 = arith.constant 0 : i32
    %c0_i32_0 = arith.constant 0 : i32
    %c0_i32_1 = arith.constant 0 : i32
    return %arg0, %c0_i32, %c0_i32_0 : i32, i32, i32
  }
  func.func @transform_11(%arg0: i32) -> (i32, i32, i32) {
    %c0_i32 = arith.constant 0 : i32
    %c0_i32_0 = arith.constant 0 : i32
    %c0_i32_1 = arith.constant 0 : i32
    return %arg0, %c0_i32, %c0_i32_0 : i32, i32, i32
  }
  func.func @transform_12(%arg0: i32) -> (i32, i32, i32) {
    %c0_i32 = arith.constant 0 : i32
    %c0_i32_0 = arith.constant 0 : i32
    %c0_i32_1 = arith.constant 0 : i32
    return %arg0, %c0_i32, %c0_i32_0 : i32, i32, i32
  }
  func.func @transform_13(%arg0: i32) -> (i32, i32, i32) {
    %c0_i32 = arith.constant 0 : i32
    %c0_i32_0 = arith.constant 0 : i32
    %c0_i32_1 = arith.constant 0 : i32
    return %arg0, %c0_i32, %c0_i32_0 : i32, i32, i32
  }
}

</mosaic_0001>

<llo_original>
// kernel: policy_forward.1
$region0: #{policy_forward.1}
  #allocation0 [shape = 'u32[]', space=smem, size = 0x4, offset = 0x4, fixed_abs, tag = 'smem constant byte address 0x4 - core index']
  #allocation1 [shape = 'u32[144,128]{1,0:T(1,128)}', space=vmem, size = 0x12000, scoped, tag = 'internal scratch']
  %s0 = inlined_call_operand.vmem [shape: f32[2,8,32], index: 0, kind: input, shape index: {}]
  %s1 = inlined_call_operand.vmem [shape: f32[8,128], index: 1, kind: input, shape index: {}]
  %s2 = inlined_call_operand.vmem [shape: f32[2,8,128], index: 2, kind: input, shape index: {}, may-alias: {2,12}]
  %s3 = inlined_call_operand.vmem [shape: f32[2,8,128], index: 3, kind: input, shape index: {}, may-alias: {3,13}]
  %s4 = inlined_call_operand.vmem [shape: f32[8,128], index: 4, kind: input, shape index: {}]
  %s5 = inlined_call_operand.vmem [shape: bf16[2,32,128], index: 5, kind: input, shape index: {}]
  %s6 = inlined_call_operand.vmem [shape: f32[2,8,128], index: 6, kind: input, shape index: {}]
  %s7 = inlined_call_operand.hbm [shape: bf16[2,256,256], index: 7, kind: input, shape index: {}]
  %s8 = inlined_call_operand.vmem [shape: f32[2,8,256], index: 8, kind: input, shape index: {}]
  %s9 = inlined_call_operand.vmem [shape: bf16[2,128,128], index: 9, kind: input, shape index: {}]
  %s10 = inlined_call_operand.vmem [shape: f32[2,8,128], index: 10, kind: input, shape index: {}]
  %s11 = inlined_call_operand.vmem [shape: f32[2,8,128], index: 11, kind: output, shape index: {0}]
  %s12 = inlined_call_operand.vmem [shape: f32[2,8,128], index: 12, kind: output, shape index: {1}, may-alias: {2,12}]
  %s13 = inlined_call_operand.vmem [shape: f32[2,8,128], index: 13, kind: output, shape index: {2}, may-alias: {3,13}]
  %14 = xla_tuple %s11, %s12, %s13
  %s15 = sld [smem:[#allocation0]]
  $region97: #{policy_forward.1} parent=0
    _
  %s17 = ssub.s32 1, %s15
  %s18 = scalar_select 0, %s17, %s15
  $region1: #{policy_forward.1} parent=0
    #allocation2 [shape = 'u8[262144]{0}', space=vmem, size = 0x40000, scoped, tag = 'input window, operand 7']
    #allocation3 [shape = 's32[2]{0}', space=sflag, size = 0x8, scoped, tag = 'scoped memory for policy_forward.1']
    %19 = vsyncpa [#allocation3], 0
    %s20 = scalar_lea.sflag [#allocation3], 1
    %21 = vsyncpa %s20, 0
    loop: start=0, step=1, limit=4
    $region2: #{policy_forward.1} parent=1 // loop_pre_header
      _
    $region3: #{policy_forward.1} parent=1 // loop_header
      %s23 = sphi 0, %s27
      %p24 = scmp.ge.s32.totalorder %s23, 4
      %s33 = sphi 0, %s35
      %s36 = sphi 0, %s33
      %s37 = sphi 0, %s36
      %s53 = sphi 0, %s37
      %s57 = sphi 0, %s57
      %s59 = sphi 0, %s57
      %s60 = sphi 0, %s59
      %s74 = sphi 0, %s60
      %s80 = sphi 0, %s82
      %s83 = sphi 0, %s80
      %s84 = sphi 0, %s83
      %s100 = sphi 0, %s84
      %s106 = sphi 0, %s108
      %s109 = sphi 0, %s106
      %s110 = sphi 0, %s109
      %s126 = sphi 0, %s110
      %s130 = sphi 0, %s130
      %s132 = sphi 0, %s130
      %s133 = sphi 0, %s132
      %s147 = sphi 0, %s133
      %s153 = sphi 0, %s155
      %s156 = sphi 0, %s153
      %s157 = sphi 0, %s156
      %s173 = sphi 0, %s157
      %s179 = sphi 0, %s181
      %s182 = sphi 0, %s179
      %s183 = sphi 0, %s182
      %s199 = sphi 0, %s183
      %s205 = sphi 0, %s207
      %s208 = sphi 0, %s205
      %s209 = sphi 0, %s208
      %s225 = sphi 0, %s209
      %s231 = sphi 0, %s233
      %s234 = sphi 0, %s231
      %s235 = sphi 0, %s234
      %s251 = sphi 0, %s235
      %s257 = sphi 0, %s259
      %s260 = sphi 0, %s257
      %s261 = sphi 0, %s260
      %s277 = sphi 0, %s261
      %s283 = sphi 0, %s285
      %s286 = sphi 0, %s283
      %s287 = sphi 0, %s286
      %s303 = sphi 0, %s287
      %s309 = sphi 0, %s311
      %s312 = sphi 0, %s309
      %s313 = sphi 0, %s312
      %s329 = sphi 0, %s313
      %s335 = sphi 0, %s337
      %s338 = sphi 0, %s335
      %s339 = sphi 0, %s338
      %s355 = sphi 0, %s339
      %s361 = sphi 0, %s363
      %s364 = sphi 0, %s361
      %s365 = sphi 0, %s364
      %s381 = sphi 0, %s365
    $region4: #{policy_forward.1} parent=1 // loop_header_branch
      %26 = sbr.rel (%p24) target = $region8
    $region5: #{policy_forward.1} parent=1 // loop_body
      %s28 = ssub.s32 %s23, 1
      %s29 = ssub.s32 %s23, 2
      %s30 = sadd.s32 %s23, 1
      %s31 = ssub.s32 %s23, %s30
      %p32 = scmp.eq.s32.totalorder %s31, 0
      %s34 = sadd.s32 %s33, 1
      %s35 = scalar_select %p32, %s33, %s34
      %p38 = pneg %p32
      %p39 = scmp.eq.s32.totalorder %s23, 1
      %p40 = por %p38, %p39
      %p41 = scmp.ne.s32.totalorder %s33, %s36
      %p42 = scmp.eq.s32.totalorder %s23, 0
      %p43 = por %p41, %p42
      %p44 = scmp.ne.s32.totalorder %s33, %s36
      %p45 = scmp.eq.s32.totalorder %s28, 1
      %p46 = por %p44, %p45
      %p47 = scmp.ne.s32.totalorder %s36, %s37
      %p48 = scmp.eq.s32.totalorder %s28, 0
      %p49 = por %p47, %p48
      %p50 = scmp.ne.s32.totalorder %s36, %s37
      %p51 = scmp.eq.s32.totalorder %s29, 1
      %p52 = por %p50, %p51
      %p54 = scmp.ne.s32.totalorder %s37, %s53
      %p55 = scmp.eq.s32.totalorder %s29, 0
      %p56 = por %p54, %p55
      %s58 = sadd.s32 %s57, 1
      %p61 = scmp.eq.s32.totalorder %s23, 1
      %p62 = scmp.ne.s32.totalorder %s57, %s59
      %p63 = scmp.eq.s32.totalorder %s23, 0
      %p64 = por %p62, %p63
      %p65 = scmp.ne.s32.totalorder %s57, %s59
      %p66 = scmp.eq.s32.totalorder %s28, 1
      %p67 = por %p65, %p66
      %p68 = scmp.ne.s32.totalorder %s59, %s60
      %p69 = scmp.eq.s32.totalorder %s28, 0
      %p70 = por %p68, %p69
      %p71 = scmp.ne.s32.totalorder %s59, %s60
      %p72 = scmp.eq.s32.totalorder %s29, 1
      %p73 = por %p71, %p72
      %p75 = scmp.ne.s32.totalorder %s60, %s74
      %p76 = scmp.eq.s32.totalorder %s29, 0
      %p77 = por %p75, %p76
      %s78 = ssub.s32 %s23, %s30
      %p79 = scmp.eq.s32.totalorder %s78, 0
      %s81 = sadd.s32 %s80, 1
      %s82 = scalar_select %p79, %s80, %s81
      %p85 = pneg %p79
      %p86 = scmp.eq.s32.totalorder %s23, 1
      %p87 = por %p85, %p86
      %p88 = scmp.ne.s32.totalorder %s80, %s83
      %p89 = scmp.eq.s32.totalorder %s23, 0
      %p90 = por %p88, %p89
      %p91 = scmp.ne.s32.totalorder %s80, %s83
      %p92 = scmp.eq.s32.totalorder %s28, 1
      %p93 = por %p91, %p92
      %p94 = scmp.ne.s32.totalorder %s83, %s84
      %p95 = scmp.eq.s32.totalorder %s28, 0
      %p96 = por %p94, %p95
      %p97 = scmp.ne.s32.totalorder %s83, %s84
      %p98 = scmp.eq.s32.totalorder %s29, 1
      %p99 = por %p97, %p98
      %p101 = scmp.ne.s32.totalorder %s84, %s100
      %p102 = scmp.eq.s32.totalorder %s29, 0
      %p103 = por %p101, %p102
      %s104 = ssub.s32 %s23, %s30
      %p105 = scmp.eq.s32.totalorder %s104, 0
      %s107 = sadd.s32 %s106, 1
      %s108 = scalar_select %p105, %s106, %s107
      %p111 = pneg %p105
      %p112 = scmp.eq.s32.totalorder %s23, 1
      %p113 = por %p111, %p112
      %p114 = scmp.ne.s32.totalorder %s106, %s109
      %p115 = scmp.eq.s32.totalorder %s23, 0
      %p116 = por %p114, %p115
      %p117 = scmp.ne.s32.totalorder %s106, %s109
      %p118 = scmp.eq.s32.totalorder %s28, 1
      %p119 = por %p117, %p118
      %p120 = scmp.ne.s32.totalorder %s109, %s110
      %p121 = scmp.eq.s32.totalorder %s28, 0
      %p122 = por %p120, %p121
      %p123 = scmp.ne.s32.totalorder %s109, %s110
      %p124 = scmp.eq.s32.totalorder %s29, 1
      %p125 = por %p123, %p124
      %p127 = scmp.ne.s32.totalorder %s110, %s126
      %p128 = scmp.eq.s32.totalorder %s29, 0
      %p129 = por %p127, %p128
      %s131 = sadd.s32 %s130, 1
      %p134 = scmp.eq.s32.totalorder %s23, 1
      %p135 = scmp.ne.s32.totalorder %s130, %s132
      %p136 = scmp.eq.s32.totalorder %s23, 0
      %p137 = por %p135, %p136
      %p138 = scmp.ne.s32.totalorder %s130, %s132
      %p139 = scmp.eq.s32.totalorder %s28, 1
      %p140 = por %p138, %p139
      %p141 = scmp.ne.s32.totalorder %s132, %s133
      %p142 = scmp.eq.s32.totalorder %s28, 0
      %p143 = por %p141, %p142
      %p144 = scmp.ne.s32.totalorder %s132, %s133
      %p145 = scmp.eq.s32.totalorder %s29, 1
      %p146 = por %p144, %p145
      %p148 = scmp.ne.s32.totalorder %s133, %s147
      %p149 = scmp.eq.s32.totalorder %s29, 0
      %p150 = por %p148, %p149
      %s151 = ssub.s32 %s23, %s30
      %p152 = scmp.eq.s32.totalorder %s151, 0
      %s154 = sadd.s32 %s153, 1
      %s155 = scalar_select %p152, %s153, %s154
      %p158 = pneg %p152
      %p159 = scmp.eq.s32.totalorder %s23, 1
      %p160 = por %p158, %p159
      %p161 = scmp.ne.s32.totalorder %s153, %s156
      %p162 = scmp.eq.s32.totalorder %s23, 0
      %p163 = por %p161, %p162
      %p164 = scmp.ne.s32.totalorder %s153, %s156
      %p165 = scmp.eq.s32.totalorder %s28, 1
      %p166 = por %p164, %p165
      %p167 = scmp.ne.s32.totalorder %s156, %s157
      %p168 = scmp.eq.s32.totalorder %s28, 0
      %p169 = por %p167, %p168
      %p170 = scmp.ne.s32.totalorder %s156, %s157
      %p171 = scmp.eq.s32.totalorder %s29, 1
      %p172 = por %p170, %p171
      %p174 = scmp.ne.s32.totalorder %s157, %s173
      %p175 = scmp.eq.s32.totalorder %s29, 0
      %p176 = por %p174, %p175
      %s177 = ssub.s32 %s23, %s30
      %p178 = scmp.eq.s32.totalorder %s177, 0
      %s180 = sadd.s32 %s179, 1
      %s181 = scalar_select %p178, %s179, %s180
      %p184 = pneg %p178
      %p185 = scmp.eq.s32.totalorder %s23, 1
      %p186 = por %p184, %p185
      %p187 = scmp.ne.s32.totalorder %s179, %s182
      %p188 = scmp.eq.s32.totalorder %s23, 0
      %p189 = por %p187, %p188
      %p190 = scmp.ne.s32.totalorder %s179, %s182
      %p191 = scmp.eq.s32.totalorder %s28, 1
      %p192 = por %p190, %p191
      %p193 = scmp.ne.s32.totalorder %s182, %s183
      %p194 = scmp.eq.s32.totalorder %s28, 0
      %p195 = por %p193, %p194
      %p196 = scmp.ne.s32.totalorder %s182, %s183
      %p197 = scmp.eq.s32.totalorder %s29, 1
      %p198 = por %p196, %p197
      %p200 = scmp.ne.s32.totalorder %s183, %s199
      %p201 = scmp.eq.s32.totalorder %s29, 0
      %p202 = por %p200, %p201
      %s203 = ssub.s32 %s23, %s30
      %p204 = scmp.eq.s32.totalorder %s203, 0
      %s206 = sadd.s32 %s205, 1
      %s207 = scalar_select %p204, %s205, %s206
      %p210 = pneg %p204
      %p211 = scmp.eq.s32.totalorder %s23, 1
      %p212 = por %p210, %p211
      %p213 = scmp.ne.s32.totalorder %s205, %s208
      %p214 = scmp.eq.s32.totalorder %s23, 0
      %p215 = por %p213, %p214
      %p216 = scmp.ne.s32.totalorder %s205, %s208
      %p217 = scmp.eq.s32.totalorder %s28, 1
      %p218 = por %p216, %p217
      %p219 = scmp.ne.s32.totalorder %s208, %s209
      %p220 = scmp.eq.s32.totalorder %s28, 0
      %p221 = por %p219, %p220
      %p222 = scmp.ne.s32.totalorder %s208, %s209
      %p223 = scmp.eq.s32.totalorder %s29, 1
      %p224 = por %p222, %p223
      %p226 = scmp.ne.s32.totalorder %s209, %s225
      %p227 = scmp.eq.s32.totalorder %s29, 0
      %p228 = por %p226, %p227
      %s229 = ssub.s32 %s23, %s30
      %p230 = scmp.eq.s32.totalorder %s229, 0
      %s232 = sadd.s32 %s231, 1
      %s233 = scalar_select %p230, %s231, %s232
      %p236 = pneg %p230
      %p237 = scmp.eq.s32.totalorder %s23, 1
      %p238 = por %p236, %p237
      %p239 = scmp.ne.s32.totalorder %s231, %s234
      %p240 = scmp.eq.s32.totalorder %s23, 0
      %p241 = por %p239, %p240
      %p242 = scmp.ne.s32.totalorder %s231, %s234
      %p243 = scmp.eq.s32.totalorder %s28, 1
      %p244 = por %p242, %p243
      %p245 = scmp.ne.s32.totalorder %s234, %s235
      %p246 = scmp.eq.s32.totalorder %s28, 0
      %p247 = por %p245, %p246
      %p248 = scmp.ne.s32.totalorder %s234, %s235
      %p249 = scmp.eq.s32.totalorder %s29, 1
      %p250 = por %p248, %p249
      %p252 = scmp.ne.s32.totalorder %s235, %s251
      %p253 = scmp.eq.s32.totalorder %s29, 0
      %p254 = por %p252, %p253
      %s255 = ssub.s32 %s23, %s30
      %p256 = scmp.eq.s32.totalorder %s255, 0
      %s258 = sadd.s32 %s257, 1
      %s259 = scalar_select %p256, %s257, %s258
      %p262 = pneg %p256
      %p263 = scmp.eq.s32.totalorder %s23, 1
      %p264 = por %p262, %p263
      %p265 = scmp.ne.s32.totalorder %s257, %s260
      %p266 = scmp.eq.s32.totalorder %s23, 0
      %p267 = por %p265, %p266
      %p268 = scmp.ne.s32.totalorder %s257, %s260
      %p269 = scmp.eq.s32.totalorder %s28, 1
      %p270 = por %p268, %p269
      %p271 = scmp.ne.s32.totalorder %s260, %s261
      %p272 = scmp.eq.s32.totalorder %s28, 0
      %p273 = por %p271, %p272
      %p274 = scmp.ne.s32.totalorder %s260, %s261
      %p275 = scmp.eq.s32.totalorder %s29, 1
      %p276 = por %p274, %p275
      %p278 = scmp.ne.s32.totalorder %s261, %s277
      %p279 = scmp.eq.s32.totalorder %s29, 0
      %p280 = por %p278, %p279
      %s281 = ssub.s32 %s23, %s30
      %p282 = scmp.eq.s32.totalorder %s281, 0
      %s284 = sadd.s32 %s283, 1
      %s285 = scalar_select %p282, %s283, %s284
      %p288 = pneg %p282
      %p289 = scmp.eq.s32.totalorder %s23, 1
      %p290 = por %p288, %p289
      %p291 = scmp.ne.s32.totalorder %s283, %s286
      %p292 = scmp.eq.s32.totalorder %s23, 0
      %p293 = por %p291, %p292
      %p294 = scmp.ne.s32.totalorder %s283, %s286
      %p295 = scmp.eq.s32.totalorder %s28, 1
      %p296 = por %p294, %p295
      %p297 = scmp.ne.s32.totalorder %s286, %s287
      %p298 = scmp.eq.s32.totalorder %s28, 0
      %p299 = por %p297, %p298
      %p300 = scmp.ne.s32.totalorder %s286, %s287
      %p301 = scmp.eq.s32.totalorder %s29, 1
      %p302 = por %p300, %p301
      %p304 = scmp.ne.s32.totalorder %s287, %s303
      %p305 = scmp.eq.s32.totalorder %s29, 0
      %p306 = por %p304, %p305
      %s307 = ssub.s32 %s23, %s30
      %p308 = scmp.eq.s32.totalorder %s307, 0
      %s310 = sadd.s32 %s309, 1
      %s311 = scalar_select %p308, %s309, %s310
      %p314 = pneg %p308
      %p315 = scmp.eq.s32.totalorder %s23, 1
      %p316 = por %p314, %p315
      %p317 = scmp.ne.s32.totalorder %s309, %s312
      %p318 = scmp.eq.s32.totalorder %s23, 0
      %p319 = por %p317, %p318
      %p320 = scmp.ne.s32.totalorder %s309, %s312
      %p321 = scmp.eq.s32.totalorder %s28, 1
      %p322 = por %p320, %p321
      %p323 = scmp.ne.s32.totalorder %s312, %s313
      %p324 = scmp.eq.s32.totalorder %s28, 0
      %p325 = por %p323, %p324
      %p326 = scmp.ne.s32.totalorder %s312, %s313
      %p327 = scmp.eq.s32.totalorder %s29, 1
      %p328 = por %p326, %p327
      %p330 = scmp.ne.s32.totalorder %s313, %s329
      %p331 = scmp.eq.s32.totalorder %s29, 0
      %p332 = por %p330, %p331
      %s333 = ssub.s32 %s23, %s30
      %p334 = scmp.eq.s32.totalorder %s333, 0
      %s336 = sadd.s32 %s335, 1
      %s337 = scalar_select %p334, %s335, %s336
      %p340 = pneg %p334
      %p341 = scmp.eq.s32.totalorder %s23, 1
      %p342 = por %p340, %p341
      %p343 = scmp.ne.s32.totalorder %s335, %s338
      %p344 = scmp.eq.s32.totalorder %s23, 0
      %p345 = por %p343, %p344
      %p346 = scmp.ne.s32.totalorder %s335, %s338
      %p347 = scmp.eq.s32.totalorder %s28, 1
      %p348 = por %p346, %p347
      %p349 = scmp.ne.s32.totalorder %s338, %s339
      %p350 = scmp.eq.s32.totalorder %s28, 0
      %p351 = por %p349, %p350
      %p352 = scmp.ne.s32.totalorder %s338, %s339
      %p353 = scmp.eq.s32.totalorder %s29, 1
      %p354 = por %p352, %p353
      %p356 = scmp.ne.s32.totalorder %s339, %s355
      %p357 = scmp.eq.s32.totalorder %s29, 0
      %p358 = por %p356, %p357
      %s359 = ssub.s32 %s23, %s30
      %p360 = scmp.eq.s32.totalorder %s359, 0
      %s362 = sadd.s32 %s361, 1
      %s363 = scalar_select %p360, %s361, %s362
      %p366 = pneg %p360
      %p367 = scmp.eq.s32.totalorder %s23, 1
      %p368 = por %p366, %p367
      %p369 = scmp.ne.s32.totalorder %s361, %s364
      %p370 = scmp.eq.s32.totalorder %s23, 0
      %p371 = por %p369, %p370
      %p372 = scmp.ne.s32.totalorder %s361, %s364
      %p373 = scmp.eq.s32.totalorder %s28, 1
      %p374 = por %p372, %p373
      %p375 = scmp.ne.s32.totalorder %s364, %s365
      %p376 = scmp.eq.s32.totalorder %s28, 0
      %p377 = por %p375, %p376
      %p378 = scmp.ne.s32.totalorder %s364, %s365
      %p379 = scmp.eq.s32.totalorder %s29, 1
      %p380 = por %p378, %p379
      %p382 = scmp.ne.s32.totalorder %s365, %s381
      %p383 = scmp.eq.s32.totalorder %s29, 0
      %p384 = por %p382, %p383
      %p385 = scmp.le.s32.totalorder 1, %s23
      %p386 = scmp.lt.s32.totalorder %s23, 3
      %p387 = pnand %p385, %p386
      %p388 = pneg %p387
      // Predicated region
      $region9: #{policy_forward.1} parent=5 // pred_check
        _
      $region10: #{policy_forward.1} parent=5 // pred_check_branch
        %390 = sbr.rel (%p387) target = $region12
      $region11: #{policy_forward.1} parent=5 // pred_region
        %s391 = ssub.s32 %s23, 1
        // Predicated region
        $region13: #{policy_forward.1} parent=11 // pred_check
          %p392 = pneg %p70
        $region14: #{policy_forward.1} parent=11 // pred_check_branch
          %394 = sbr.rel (%p392) target = $region16
        $region15: #{policy_forward.1} parent=11 // pred_region
          _
        $region16: #{policy_forward.1} parent=11 // pred_fallthru
          _
        // Predicated region
        $region17: #{policy_forward.1} parent=11 // pred_check
          %p395 = pneg %p143
        $region18: #{policy_forward.1} parent=11 // pred_check_branch
          %397 = sbr.rel (%p395) target = $region20
        $region19: #{policy_forward.1} parent=11 // pred_region
          _
        $region20: #{policy_forward.1} parent=11 // pred_fallthru
          _
      $region12: #{policy_forward.1} parent=5 // pred_fallthru
        _
      %p398 = scmp.lt.s32.totalorder %s23, 2
      // Predicated region
      $region21: #{policy_forward.1} parent=5 // pred_check
        %p399 = pneg %p398
      $region22: #{policy_forward.1} parent=5 // pred_check_branch
        %401 = sbr.rel (%p399) target = $region24
      $region23: #{policy_forward.1} parent=5 // pred_region
        // Predicated region
        $region25: #{policy_forward.1} parent=23 // pred_check
          %p402 = pneg %p43
        $region26: #{policy_forward.1} parent=23 // pred_check_branch
          %404 = sbr.rel (%p402) target = $region28
        $region27: #{policy_forward.1} parent=23 // pred_region
          %p405 = scmp.lt.s32.totalorder %s23, 1
          %s406 = scalar_select %p405, %s23, 1
          %s407 = smul.addr %s406, 8
          %s408 = scalar_lea.vmem %s0, %s407
        $region28: #{policy_forward.1} parent=23 // pred_fallthru
          _
        // Predicated region
        $region29: #{policy_forward.1} parent=23 // pred_check
          %p409 = pneg %p90
        $region30: #{policy_forward.1} parent=23 // pred_check_branch
          %411 = sbr.rel (%p409) target = $region32
        $region31: #{policy_forward.1} parent=23 // pred_region
          %p412 = scmp.lt.s32.totalorder %s23, 1
          %s413 = scalar_select %p412, %s23, 1
          %s414 = smul.addr %s413, 8
          %s415 = scalar_lea.vmem %s2, %s414
        $region32: #{policy_forward.1} parent=23 // pred_fallthru
          _
        // Predicated region
        $region33: #{policy_forward.1} parent=23 // pred_check
          %p416 = pneg %p116
        $region34: #{policy_forward.1} parent=23 // pred_check_branch
          %418 = sbr.rel (%p416) target = $region36
        $region35: #{policy_forward.1} parent=23 // pred_region
          %p419 = scmp.lt.s32.totalorder %s23, 1
          %s420 = scalar_select %p419, %s23, 1
          %s421 = smul.addr %s420, 8
          %s422 = scalar_lea.vmem %s3, %s421
        $region36: #{policy_forward.1} parent=23 // pred_fallthru
          _
        // Predicated region
        $region37: #{policy_forward.1} parent=23 // pred_check
          %p423 = pneg %p163
        $region38: #{policy_forward.1} parent=23 // pred_check_branch
          %425 = sbr.rel (%p423) target = $region40
        $region39: #{policy_forward.1} parent=23 // pred_region
          %p426 = scmp.lt.s32.totalorder %s23, 1
          %s427 = scalar_select %p426, %s23, 1
          %s428 = smul.addr %s427, 4
          %s429 = smul.addr %s428, 4
          %s430 = scalar_lea.vmem %s5, %s429
        $region40: #{policy_forward.1} parent=23 // pred_fallthru
          _
        // Predicated region
        $region41: #{policy_forward.1} parent=23 // pred_check
          %p431 = pneg %p189
        $region42: #{policy_forward.1} parent=23 // pred_check_branch
          %433 = sbr.rel (%p431) target = $region44
        $region43: #{policy_forward.1} parent=23 // pred_region
          %p434 = scmp.lt.s32.totalorder %s23, 1
          %s435 = scalar_select %p434, %s23, 1
          %s436 = smul.addr %s435, 8
          %s437 = scalar_lea.vmem %s6, %s436
        $region44: #{policy_forward.1} parent=23 // pred_fallthru
          _
        // Predicated region
        $region45: #{policy_forward.1} parent=23 // pred_check
          %p438 = pneg %p215
        $region46: #{policy_forward.1} parent=23 // pred_check_branch
          %440 = sbr.rel (%p438) target = $region48
        $region47: #{policy_forward.1} parent=23 // pred_region
          %s441 = sand.u32 %s205, 1
          %s442 = scalar_lea.sflag [#allocation3], %s441
          %s443 = sand.u32 %s205, 1
          %s444 = smul.addr %s443, 256
          %s445 = scalar_lea.vmem [#allocation2], %s444
          %s447 = ssub.s32 4096, 4096
          %448 = vsyncadd %s442, %s447
          %s449 = smul.addr %s23, 64
          %s450 = smul.addr %s449, 64
          %s451 = scalar_lea.hbm %s7, %s450
          %s452 = sshll.u32 %s445, 4
          %s453 = int_to_ptr.vmem [resolvable:$true] %s452
          %458 = dma.hbm_to_vmem [thread:$0]  %s451, 4096, %s453, %s442, 128, 128, 8
        $region48: #{policy_forward.1} parent=23 // pred_fallthru
          _
        // Predicated region
        $region49: #{policy_forward.1} parent=23 // pred_check
          %p459 = pneg %p241
        $region50: #{policy_forward.1} parent=23 // pred_check_branch
          %461 = sbr.rel (%p459) target = $region52
        $region51: #{policy_forward.1} parent=23 // pred_region
          %p462 = scmp.lt.s32.totalorder %s23, 1
          %s463 = scalar_select %p462, %s23, 1
          %s464 = smul.addr %s463, 2
          %s465 = smul.addr %s464, 8
          %s466 = scalar_lea.vmem %s8, %s465
        $region52: #{policy_forward.1} parent=23 // pred_fallthru
          _
        // Predicated region
        $region53: #{policy_forward.1} parent=23 // pred_check
          %p467 = pneg %p267
        $region54: #{policy_forward.1} parent=23 // pred_check_branch
          %469 = sbr.rel (%p467) target = $region56
        $region55: #{policy_forward.1} parent=23 // pred_region
          %p470 = scmp.lt.s32.totalorder %s23, 1
          %s471 = scalar_select %p470, %s23, 1
          %s472 = smul.addr %s471, 16
          %s473 = smul.addr %s472, 4
          %s474 = scalar_lea.vmem %s9, %s473
        $region56: #{policy_forward.1} parent=23 // pred_fallthru
          _
        // Predicated region
        $region57: #{policy_forward.1} parent=23 // pred_check
          %p475 = pneg %p293
        $region58: #{policy_forward.1} parent=23 // pred_check_branch
          %477 = sbr.rel (%p475) target = $region60
        $region59: #{policy_forward.1} parent=23 // pred_region
          %p478 = scmp.lt.s32.totalorder %s23, 1
          %s479 = scalar_select %p478, %s23, 1
          %s480 = smul.addr %s479, 8
          %s481 = scalar_lea.vmem %s10, %s480
        $region60: #{policy_forward.1} parent=23 // pred_fallthru
          _
      $region24: #{policy_forward.1} parent=5 // pred_fallthru
        _
      %p482 = scmp.le.s32.totalorder 1, %s23
      %p483 = scmp.lt.s32.totalorder %s23, 3
      %p484 = pnand %p482, %p483
      %p485 = pneg %p484
      // Predicated region
      $region61: #{policy_forward.1} parent=5 // pred_check
        _
      $region62: #{policy_forward.1} parent=5 // pred_check_branch
        %487 = sbr.rel (%p484) target = $region64
      $region63: #{policy_forward.1} parent=5 // pred_region
        %s488 = ssub.s32 %s23, 1
        %s489 = sand.u32 %s208, 1
        %s490 = scalar_lea.sflag [#allocation3], %s489
        %s491 = sand.u32 %s208, 1
        %s492 = smul.addr %s491, 256
        %s493 = scalar_lea.vmem [#allocation2], %s492
        // Predicated region
        $region65: #{policy_forward.1} parent=63 // pred_check
          %p494 = pneg %p221
        $region66: #{policy_forward.1} parent=63 // pred_check_branch
          %496 = sbr.rel (%p494) target = $region68
        $region67: #{policy_forward.1} parent=63 // pred_region
          %497 = dma.done %s490, 4096
        $region68: #{policy_forward.1} parent=63 // pred_fallthru
          _
        %p498 = scmp.lt.s32.totalorder %s28, 1
        %s499 = scalar_select %p498, %s28, 1
        %s500 = smul.addr %s499, 8
        %s501 = scalar_lea.vmem %s0, %s500
        %p502 = pneg %p49
        %p503 = pneg %p46
        %p504 = pneg %p70
        %p505 = pneg %p67
        %p506 = scmp.lt.s32.totalorder %s28, 1
        %s507 = scalar_select %p506, %s28, 1
        %s508 = smul.addr %s507, 8
        %s509 = scalar_lea.vmem %s2, %s508
        %p510 = pneg %p96
        %p511 = pneg %p93
        %p512 = scmp.lt.s32.totalorder %s28, 1
        %s513 = scalar_select %p512, %s28, 1
        %s514 = smul.addr %s513, 8
        %s515 = scalar_lea.vmem %s3, %s514
        %p516 = pneg %p122
        %p517 = pneg %p119
        %p518 = pneg %p143
        %p519 = pneg %p140
        %p520 = scmp.lt.s32.totalorder %s28, 1
        %s521 = scalar_select %p520, %s28, 1
        %s522 = smul.addr %s521, 4
        %s523 = smul.addr %s522, 4
        %s524 = scalar_lea.vmem %s5, %s523
        %p525 = pneg %p169
        %p526 = pneg %p166
        %p527 = scmp.lt.s32.totalorder %s28, 1
        %s528 = scalar_select %p527, %s28, 1
        %s529 = smul.addr %s528, 8
        %s530 = scalar_lea.vmem %s6, %s529
        %p531 = pneg %p195
        %p532 = pneg %p192
        %s533 = sand.u32 %s208, 1
        %s534 = scalar_lea.sflag [#allocation3], %s533
        %s535 = sand.u32 %s208, 1
        %s536 = smul.addr %s535, 256
        %s537 = scalar_lea.vmem [#allocation2], %s536
        %p538 = pneg %p221
        %p539 = pneg %p218
        %p540 = scmp.lt.s32.totalorder %s28, 1
        %s541 = scalar_select %p540, %s28, 1
        %s542 = smul.addr %s541, 2
        %s543 = smul.addr %s542, 8
        %s544 = scalar_lea.vmem %s8, %s543
        %p545 = pneg %p247
        %p546 = pneg %p244
        %p547 = scmp.lt.s32.totalorder %s28, 1
        %s548 = scalar_select %p547, %s28, 1
        %s549 = smul.addr %s548, 16
        %s550 = smul.addr %s549, 4
        %s551 = scalar_lea.vmem %s9, %s550
        %p552 = pneg %p273
        %p553 = pneg %p270
        %p554 = scmp.lt.s32.totalorder %s28, 1
        %s555 = scalar_select %p554, %s28, 1
        %s556 = smul.addr %s555, 8
        %s557 = scalar_lea.vmem %s10, %s556
        %p558 = pneg %p299
        %p559 = pneg %p296
        %p560 = pneg %p325
        %p561 = pneg %p322
        %p562 = scmp.lt.s32.totalorder %s28, 1
        %s563 = scalar_select %p562, %s28, 1
        %s564 = smul.addr %s563, 8
        %s565 = scalar_lea.vmem %s11, %s564
        %p566 = pneg %p351
        %p567 = pneg %p348
        %p568 = scmp.lt.s32.totalorder %s28, 1
        %s569 = scalar_select %p568, %s28, 1
        %s570 = smul.addr %s569, 8
        %s571 = scalar_lea.vmem %s12, %s570
        %p572 = pneg %p377
        %p573 = pneg %p374
        %p574 = scmp.lt.s32.totalorder %s28, 1
        %s575 = scalar_select %p574, %s28, 1
        %s576 = smul.addr %s575, 8
        %s577 = scalar_lea.vmem %s13, %s576
        %p578 = scmp.lt.s32.totalorder %s28, 1
        %s579 = scalar_select %p578, %s28, 1
        %s580 = smul.addr %s579, 8
        %s581 = scalar_lea.vmem %s0, %s580
        %p582 = scmp.lt.s32.totalorder %s28, 1
        %s583 = scalar_select %p582, %s28, 1
        %s584 = smul.addr %s583, 8
        %s585 = scalar_lea.vmem %s2, %s584
        %p586 = scmp.lt.s32.totalorder %s28, 1
        %s587 = scalar_select %p586, %s28, 1
        %s588 = smul.addr %s587, 8
        %s589 = scalar_lea.vmem %s3, %s588
        %p590 = scmp.lt.s32.totalorder %s28, 1
        %s591 = scalar_select %p590, %s28, 1
        %s592 = smul.addr %s591, 4
        %s593 = smul.addr %s592, 4
        %s594 = scalar_lea.vmem %s5, %s593
        %p595 = scmp.lt.s32.totalorder %s28, 1
        %s596 = scalar_select %p595, %s28, 1
        %s597 = smul.addr %s596, 8
        %s598 = scalar_lea.vmem %s6, %s597
        %p599 = scmp.lt.s32.totalorder %s28, 1
        %s600 = scalar_select %p599, %s28, 1
        %s601 = smul.addr %s600, 2
        %s602 = smul.addr %s601, 8
        %s603 = scalar_lea.vmem %s8, %s602
        %p604 = scmp.lt.s32.totalorder %s28, 1
        %s605 = scalar_select %p604, %s28, 1
        %s606 = smul.addr %s605, 16
        %s607 = smul.addr %s606, 4
        %s608 = scalar_lea.vmem %s9, %s607
        %p609 = scmp.lt.s32.totalorder %s28, 1
        %s610 = scalar_select %p609, %s28, 1
        %s611 = smul.addr %s610, 8
        %s612 = scalar_lea.vmem %s10, %s611
        %p613 = scmp.lt.s32.totalorder %s28, 1
        %s614 = scalar_select %p613, %s28, 1
        %s615 = smul.addr %s614, 8
        %s616 = scalar_lea.vmem %s11, %s615
        %p617 = scmp.lt.s32.totalorder %s28, 1
        %s618 = scalar_select %p617, %s28, 1
        %s619 = smul.addr %s618, 8
        %s620 = scalar_lea.vmem %s12, %s619
        %p621 = scmp.lt.s32.totalorder %s28, 1
        %s622 = scalar_select %p621, %s28, 1
        %s623 = smul.addr %s622, 8
        %s624 = scalar_lea.vmem %s13, %s623
        %v626 = vld [vmem:[%s581] sm:$0xff]
        %v627 = vpack.c.bf16 %v626, %v626
        %v628 = vld [vmem:[%s594] sm:$0xf]
        %v629 = vld [vmem:[%s594 + $0x4] sm:$0xf]
        %v630 = vld [vmem:[%s594 + $0x8] sm:$0xf]
        %v631 = vld [vmem:[%s594 + $0xc] sm:$0xf]
        %v632 = vld [vmem:[%s598] sm:$0xff]
        %v637 = vunpack.c.l.b16 %v628
        %v638 = vunpack.c.l.b16 %v629
        %v639 = vunpack.c.l.b16 %v630
        %v640 = vunpack.c.l.b16 %v631
        %v641 = vpack.c.b16 %v638, %v637
        %v642 = vpack.c.b16 %v640, %v639
        %vm645 = vcmask 261120
        %v647 = vsel %vm645, %v627, 0
        %649 = vmatprep.subr.bf16.mxu0 0
        %650 = vmatpush1.bf16.msra.mxu0 0
        %651 = vmatprep.subr.bf16.mxu0 0
        %652 = vmatpush1.bf16.msra.mxu0 0
        %653 = vmatprep.subr.bf16.mxu0 0
        %654 = vmatpush1.bf16.msra.mxu0 0
        %655 = vmatprep.subr.bf16.mxu0 0
        %656 = vmatpush1.bf16.msra.mxu0 0
        %657 = vmatprep.subr.bf16.mxu0 0
        %658 = vmatpush1.bf16.msra.mxu0 0
        %659 = vmatprep.subr.bf16.mxu0 0
        %660 = vmatpush1.bf16.msra.mxu0 0
        %661 = vmatprep.subr.bf16.mxu0 0
        %662 = vmatpush1.bf16.msra.mxu0 %v642
        %663 = vmatprep.subr.bf16.mxu0 0
        %664 = vmatpush1.bf16.msra.mxu0 %v641
        %665 = vmatprep.subr.bf16.mxu0 0
        %666 = vmatpush2.bf16.msra.mxu0 0
        %667 = vmatprep.subr.bf16.mxu0 0
        %668 = vmatpush2.bf16.msra.mxu0 0
        %669 = vmatprep.subr.bf16.mxu0 0
        %670 = vmatpush2.bf16.msra.mxu0 0
        %671 = vmatprep.subr.bf16.mxu0 0
        %672 = vmatpush2.bf16.msra.mxu0 0
        %673 = vmatprep.subr.bf16.mxu0 0
        %674 = vmatpush2.bf16.msra.mxu0 0
        %675 = vmatprep.subr.bf16.mxu0 0
        %676 = vmatpush2.bf16.msra.mxu0 0
        %677 = vmatprep.subr.bf16.mxu0 0
        %678 = vmatpush2.bf16.msra.mxu0 0
        %679 = vmatprep.subr.bf16.mxu0 0
        %680 = vmatpush2.bf16.msra.mxu0 0
        %681 = vmatprep.mubr.bf16.mxu0 0
        %682 = vmatmul.mubr.bf16.gmra.mxu0 %v647
        %v683 = vpop.f32.mrf.mxu0
        %v684 = vadd.f32 %v632, %v683
        %v685 = vpop.f32.mrf.mxu0
        %v686 = vpop.f32.mrf.mxu0
        %v687 = vpop.f32.mrf.mxu0
        %688 = vdwg.mxu0
        %v689 = vmax.f32 %v684, 0.0
        %v690 = vld [vmem:[%s1] sm:$0xff]
        %v691 = vadd.f32 %v689, %v690
        %v692 = vld [vmem:[%s585] sm:$0xff]
        %v693 = vld [vmem:[%s4] sm:$0xff]
        %v694 = vmul.f32 %v692, %v693
        %v695 = vld [vmem:[%s589] sm:$0xff]
        %v696 = vmul.f32 %v695, %v693
        %v697 = vpack.c.bf16 %v691, %v691
        %v698 = vpack.c.bf16 %v694, %v694
        %v699 = vld [vmem:[%s493] sm:$0xff]
        %v700 = vld [vmem:[%s493 + $0x8] sm:$0xff]
        %v701 = vld [vmem:[%s493 + $0x10] sm:$0xff]
        %v702 = vld [vmem:[%s493 + $0x18] sm:$0xff]
        %v703 = vld [vmem:[%s493 + $0x20] sm:$0xff]
        %v704 = vld [vmem:[%s493 + $0x28] sm:$0xff]
        %v705 = vld [vmem:[%s493 + $0x30] sm:$0xff]
        %v706 = vld [vmem:[%s493 + $0x38] sm:$0xff]
        %v707 = vld [vmem:[%s493 + $0x40] sm:$0xff]
        %v708 = vld [vmem:[%s493 + $0x48] sm:$0xff]
        %v709 = vld [vmem:[%s493 + $0x50] sm:$0xff]
        %v710 = vld [vmem:[%s493 + $0x58] sm:$0xff]
        %v711 = vld [vmem:[%s493 + $0x60] sm:$0xff]
        %v712 = vld [vmem:[%s493 + $0x68] sm:$0xff]
        %v713 = vld [vmem:[%s493 + $0x70] sm:$0xff]
        %v714 = vld [vmem:[%s493 + $0x78] sm:$0xff]
        %v715 = vld [vmem:[%s493 + $0x80] sm:$0xff]
        %v716 = vld [vmem:[%s493 + $0x88] sm:$0xff]
        %v717 = vld [vmem:[%s493 + $0x90] sm:$0xff]
        %v718 = vld [vmem:[%s493 + $0x98] sm:$0xff]
        %v719 = vld [vmem:[%s493 + $0xa0] sm:$0xff]
        %v720 = vld [vmem:[%s493 + $0xa8] sm:$0xff]
        %v721 = vld [vmem:[%s493 + $0xb0] sm:$0xff]
        %v722 = vld [vmem:[%s493 + $0xb8] sm:$0xff]
        %v723 = vld [vmem:[%s493 + $0xc0] sm:$0xff]
        %v724 = vld [vmem:[%s493 + $0xc8] sm:$0xff]
        %v725 = vld [vmem:[%s493 + $0xd0] sm:$0xff]
        %v726 = vld [vmem:[%s493 + $0xd8] sm:$0xff]
        %v727 = vld [vmem:[%s493 + $0xe0] sm:$0xff]
        %v728 = vld [vmem:[%s493 + $0xe8] sm:$0xff]
        %v729 = vld [vmem:[%s493 + $0xf0] sm:$0xff]
        %v730 = vld [vmem:[%s493 + $0xf8] sm:$0xff]
        %v731 = vld [vmem:[%s603] sm:$0xff]
        %v732 = vld [vmem:[%s603 + $0x8] sm:$0xff]
        %v765 = vunpack.c.l.b16 %v699
        %v766 = vunpack.c.h.b16 %v699
        %v767 = vunpack.c.l.b16 %v700
        %v768 = vunpack.c.h.b16 %v700
        %v769 = vunpack.c.l.b16 %v701
        %v770 = vunpack.c.h.b16 %v701
        %v771 = vunpack.c.l.b16 %v702
        %v772 = vunpack.c.h.b16 %v702
        %v773 = vunpack.c.l.b16 %v703
        %v774 = vunpack.c.h.b16 %v703
        %v775 = vunpack.c.l.b16 %v704
        %v776 = vunpack.c.h.b16 %v704
        %v777 = vunpack.c.l.b16 %v705
        %v778 = vunpack.c.h.b16 %v705
        %v779 = vunpack.c.l.b16 %v706
        %v780 = vunpack.c.h.b16 %v706
        %v781 = vunpack.c.l.b16 %v707
        %v782 = vunpack.c.h.b16 %v707
        %v783 = vunpack.c.l.b16 %v708
        %v784 = vunpack.c.h.b16 %v708
        %v785 = vunpack.c.l.b16 %v709
        %v786 = vunpack.c.h.b16 %v709
        %v787 = vunpack.c.l.b16 %v710
        %v788 = vunpack.c.h.b16 %v710
        %v789 = vunpack.c.l.b16 %v711
        %v790 = vunpack.c.h.b16 %v711
        %v791 = vunpack.c.l.b16 %v712
        %v792 = vunpack.c.h.b16 %v712
        %v793 = vunpack.c.l.b16 %v713
        %v794 = vunpack.c.h.b16 %v713
        %v795 = vunpack.c.l.b16 %v714
        %v796 = vunpack.c.h.b16 %v714
        %v797 = vunpack.c.l.b16 %v715
        %v798 = vunpack.c.h.b16 %v715
        %v799 = vunpack.c.l.b16 %v716
        %v800 = vunpack.c.h.b16 %v716
        %v801 = vunpack.c.l.b16 %v717
        %v802 = vunpack.c.h.b16 %v717
        %v803 = vunpack.c.l.b16 %v718
        %v804 = vunpack.c.h.b16 %v718
        %v805 = vunpack.c.l.b16 %v719
        %v806 = vunpack.c.h.b16 %v719
        %v807 = vunpack.c.l.b16 %v720
        %v808 = vunpack.c.h.b16 %v720
        %v809 = vunpack.c.l.b16 %v721
        %v810 = vunpack.c.h.b16 %v721
        %v811 = vunpack.c.l.b16 %v722
        %v812 = vunpack.c.h.b16 %v722
        %v813 = vunpack.c.l.b16 %v723
        %v814 = vunpack.c.h.b16 %v723
        %v815 = vunpack.c.l.b16 %v724
        %v816 = vunpack.c.h.b16 %v724
        %v817 = vunpack.c.l.b16 %v725
        %v818 = vunpack.c.h.b16 %v725
        %v819 = vunpack.c.l.b16 %v726
        %v820 = vunpack.c.h.b16 %v726
        %v821 = vunpack.c.l.b16 %v727
        %v822 = vunpack.c.h.b16 %v727
        %v823 = vunpack.c.l.b16 %v728
        %v824 = vunpack.c.h.b16 %v728
        %v825 = vunpack.c.l.b16 %v729
        %v826 = vunpack.c.h.b16 %v729
        %v827 = vunpack.c.l.b16 %v730
        %v828 = vunpack.c.h.b16 %v730
        %v829 = vpack.c.b16 %v767, %v765
        %v830 = vpack.c.b16 %v768, %v766
        %v831 = vpack.c.b16 %v771, %v769
        %v832 = vpack.c.b16 %v772, %v770
        %v833 = vpack.c.b16 %v775, %v773
        %v834 = vpack.c.b16 %v776, %v774
        %v835 = vpack.c.b16 %v779, %v777
        %v836 = vpack.c.b16 %v780, %v778
        %v837 = vpack.c.b16 %v783, %v781
        %v838 = vpack.c.b16 %v784, %v782
        %v839 = vpack.c.b16 %v787, %v785
        %v840 = vpack.c.b16 %v788, %v786
        %v841 = vpack.c.b16 %v791, %v789
        %v842 = vpack.c.b16 %v792, %v790
        %v843 = vpack.c.b16 %v795, %v793
        %v844 = vpack.c.b16 %v796, %v794
        %v845 = vpack.c.b16 %v799, %v797
        %v846 = vpack.c.b16 %v800, %v798
        %v847 = vpack.c.b16 %v803, %v801
        %v848 = vpack.c.b16 %v804, %v802
        %v849 = vpack.c.b16 %v807, %v805
        %v850 = vpack.c.b16 %v808, %v806
        %v851 = vpack.c.b16 %v811, %v809
        %v852 = vpack.c.b16 %v812, %v810
        %v853 = vpack.c.b16 %v815, %v813
        %v854 = vpack.c.b16 %v816, %v814
        %v855 = vpack.c.b16 %v819, %v817
        %v856 = vpack.c.b16 %v820, %v818
        %v857 = vpack.c.b16 %v823, %v821
        %v858 = vpack.c.b16 %v824, %v822
        %v859 = vpack.c.b16 %v827, %v825
        %v860 = vpack.c.b16 %v828, %v826
        %893 = vmatprep.subr.bf16.mxu0 %v844
        %894 = vmatpush1.bf16.msra.mxu0 %v843
        %895 = vmatprep.subr.bf16.mxu0 %v842
        %896 = vmatpush1.bf16.msra.mxu0 %v841
        %897 = vmatprep.subr.bf16.mxu0 %v840
        %898 = vmatpush1.bf16.msra.mxu0 %v839
        %899 = vmatprep.subr.bf16.mxu0 %v838
        %900 = vmatpush1.bf16.msra.mxu0 %v837
        %901 = vmatprep.subr.bf16.mxu0 %v836
        %902 = vmatpush1.bf16.msra.mxu0 %v835
        %903 = vmatprep.subr.bf16.mxu0 %v834
        %904 = vmatpush1.bf16.msra.mxu0 %v833
        %905 = vmatprep.subr.bf16.mxu0 %v832
        %906 = vmatpush1.bf16.msra.mxu0 %v831
        %907 = vmatprep.subr.bf16.mxu0 %v830
        %908 = vmatpush1.bf16.msra.mxu0 %v829
        %909 = vmatprep.subr.bf16.mxu0 %v860
        %910 = vmatpush2.bf16.msra.mxu0 %v859
        %911 = vmatprep.subr.bf16.mxu0 %v858
        %912 = vmatpush2.bf16.msra.mxu0 %v857
        %913 = vmatprep.subr.bf16.mxu0 %v856
        %914 = vmatpush2.bf16.msra.mxu0 %v855
        %915 = vmatprep.subr.bf16.mxu0 %v854
        %916 = vmatpush2.bf16.msra.mxu0 %v853
        %917 = vmatprep.subr.bf16.mxu0 %v852
        %918 = vmatpush2.bf16.msra.mxu0 %v851
        %919 = vmatprep.subr.bf16.mxu0 %v850
        %920 = vmatpush2.bf16.msra.mxu0 %v849
        %921 = vmatprep.subr.bf16.mxu0 %v848
        %922 = vmatpush2.bf16.msra.mxu0 %v847
        %923 = vmatprep.subr.bf16.mxu0 %v846
        %924 = vmatpush2.bf16.msra.mxu0 %v845
        %925 = vmatprep.mubr.bf16.mxu0 %v698
        %926 = vmatmul.mubr.bf16.gmra.mxu0 %v697
        %v927 = vpop.f32.mrf.mxu0
        %v928 = vadd.f32 %v731, %v927
        %v929 = vpop.f32.mrf.mxu0
        %v930 = vadd.f32 %v732, %v929
        %v931 = vpop.f32.mrf.mxu0
        %v932 = vpop.f32.mrf.mxu0
        %933 = vdwg.mxu0
        %v934 = vxor.u32 %v928, 2147483648
        %v935 = vmul.f32 %v934, 1.442695
        %v936 = vpow.pop %v935
        %v937 = vadd.f32 %v936, 1.0
        %v938 = vrcp.pop %v937
        %v939 = vmul.f32 1.0, %v938
        %v940 = vlaneseq
        %v941 = vand.u32 %v940, 127
        %vm942 = vcmp.lt.s32.totalorder %v941, 64
        %v943 = vtanh.pop %v930
        %v944 = vxor.u32 %v930, 2147483648
        %v945 = vmul.f32 %v944, 1.442695
        %v946 = vpow.pop %v945
        %v947 = vadd.f32 %v946, 1.0
        %v948 = vrcp.pop %v947
        %v949 = vmul.f32 1.0, %v948
        %v950 = vsel %vm942, %v943, %v949
        %v951 = vmul.f32 %v939, %v950
        %952 = vrot.lane.b32.xlu0 %v939, 64
        %v953 = vpop.permute.xlu0 %952
        %v954 = vmul.f32 %v953, %v696
        %v955 = vadd.f32 %v954, %v951
        %956 = vrot.lane.b32.xlu0 %v950, 64
        %v957 = vpop.permute.xlu0 %956
        %v958 = vtanh.pop %v955
        %v959 = vmul.f32 %v957, %v958
        %v960 = vpack.c.bf16 %v959, %v959
        %v961 = vld [vmem:[%s608] sm:$0xf]
        %v962 = vld [vmem:[%s608 + $0x4] sm:$0xf]
        %v963 = vld [vmem:[%s608 + $0x8] sm:$0xf]
        %v964 = vld [vmem:[%s608 + $0xc] sm:$0xf]
        %v965 = vld [vmem:[%s608 + $0x10] sm:$0xf]
        %v966 = vld [vmem:[%s608 + $0x14] sm:$0xf]
        %v967 = vld [vmem:[%s608 + $0x18] sm:$0xf]
        %v968 = vld [vmem:[%s608 + $0x1c] sm:$0xf]
        %v969 = vld [vmem:[%s608 + $0x20] sm:$0xf]
        %v970 = vld [vmem:[%s608 + $0x24] sm:$0xf]
        %v971 = vld [vmem:[%s608 + $0x28] sm:$0xf]
        %v972 = vld [vmem:[%s608 + $0x2c] sm:$0xf]
        %v973 = vld [vmem:[%s608 + $0x30] sm:$0xf]
        %v974 = vld [vmem:[%s608 + $0x34] sm:$0xf]
        %v975 = vld [vmem:[%s608 + $0x38] sm:$0xf]
        %v976 = vld [vmem:[%s608 + $0x3c] sm:$0xf]
        %v977 = vld [vmem:[%s612] sm:$0xff]
        %v994 = vunpack.c.l.b16 %v961
        %v995 = vunpack.c.l.b16 %v962
        %v996 = vunpack.c.l.b16 %v963
        %v997 = vunpack.c.l.b16 %v964
        %v998 = vunpack.c.l.b16 %v965
        %v999 = vunpack.c.l.b16 %v966
        %v1000 = vunpack.c.l.b16 %v967
        %v1001 = vunpack.c.l.b16 %v968
        %v1002 = vunpack.c.l.b16 %v969
        %v1003 = vunpack.c.l.b16 %v970
        %v1004 = vunpack.c.l.b16 %v971
        %v1005 = vunpack.c.l.b16 %v972
        %v1006 = vunpack.c.l.b16 %v973
        %v1007 = vunpack.c.l.b16 %v974
        %v1008 = vunpack.c.l.b16 %v975
        %v1009 = vunpack.c.l.b16 %v976
        %v1010 = vpack.c.b16 %v995, %v994
        %v1011 = vpack.c.b16 %v997, %v996
        %v1012 = vpack.c.b16 %v999, %v998
        %v1013 = vpack.c.b16 %v1001, %v1000
        %v1014 = vpack.c.b16 %v1003, %v1002
        %v1015 = vpack.c.b16 %v1005, %v1004
        %v1016 = vpack.c.b16 %v1007, %v1006
        %v1017 = vpack.c.b16 %v1009, %v1008
        %1026 = vmatprep.subr.bf16.mxu0 0
        %1027 = vmatpush1.bf16.msra.mxu0 %v1017
        %1028 = vmatprep.subr.bf16.mxu0 0
        %1029 = vmatpush1.bf16.msra.mxu0 %v1016
        %1030 = vmatprep.subr.bf16.mxu0 0
        %1031 = vmatpush1.bf16.msra.mxu0 %v1015
        %1032 = vmatprep.subr.bf16.mxu0 0
        %1033 = vmatpush1.bf16.msra.mxu0 %v1014
        %1034 = vmatprep.subr.bf16.mxu0 0
        %1035 = vmatpush1.bf16.msra.mxu0 %v1013
        %1036 = vmatprep.subr.bf16.mxu0 0
        %1037 = vmatpush1.bf16.msra.mxu0 %v1012
        %1038 = vmatprep.subr.bf16.mxu0 0
        %1039 = vmatpush1.bf16.msra.mxu0 %v1011
        %1040 = vmatprep.subr.bf16.mxu0 0
        %1041 = vmatpush1.bf16.msra.mxu0 %v1010
        %1042 = vmatprep.subr.bf16.mxu0 0
        %1043 = vmatpush2.bf16.msra.mxu0 0
        %1044 = vmatprep.subr.bf16.mxu0 0
        %1045 = vmatpush2.bf16.msra.mxu0 0
        %1046 = vmatprep.subr.bf16.mxu0 0
        %1047 = vmatpush2.bf16.msra.mxu0 0
        %1048 = vmatprep.subr.bf16.mxu0 0
        %1049 = vmatpush2.bf16.msra.mxu0 0
        %1050 = vmatprep.subr.bf16.mxu0 0
        %1051 = vmatpush2.bf16.msra.mxu0 0
        %1052 = vmatprep.subr.bf16.mxu0 0
        %1053 = vmatpush2.bf16.msra.mxu0 0
        %1054 = vmatprep.subr.bf16.mxu0 0
        %1055 = vmatpush2.bf16.msra.mxu0 0
        %1056 = vmatprep.subr.bf16.mxu0 0
        %1057 = vmatpush2.bf16.msra.mxu0 0
        %1058 = vmatprep.mubr.bf16.mxu0 0
        %1059 = vmatmul.mubr.bf16.gmra.mxu0 %v960
        %v1060 = vpop.f32.mrf.mxu0
        %v1061 = vadd.f32 %v977, %v1060
        %v1062 = vpop.f32.mrf.mxu0
        %v1063 = vpop.f32.mrf.mxu0
        %v1064 = vpop.f32.mrf.mxu0
        %1065 = vdwg.mxu0
        %1066 = vst [vmem:[%s616] sm:$0xff] %v1061
        %1067 = vst [vmem:[%s620] sm:$0xff] %v959
        %1068 = vst [vmem:[%s624] sm:$0xff] %v955
        %p1069 = scmp.lt.s32.totalorder %s28, 1
        %s1070 = scalar_select %p1069, %s28, 1
        %s1071 = smul.addr %s1070, 8
        %s1072 = scalar_lea.vmem %s11, %s1071
        %p1073 = scmp.lt.s32.totalorder %s28, 1
        %s1074 = scalar_select %p1073, %s28, 1
        %s1075 = smul.addr %s1074, 8
        %s1076 = scalar_lea.vmem %s12, %s1075
        %p1077 = scmp.lt.s32.totalorder %s28, 1
        %s1078 = scalar_select %p1077, %s28, 1
        %s1079 = smul.addr %s1078, 8
        %s1080 = scalar_lea.vmem %s13, %s1079
        // Predicated region
        $region69: #{policy_forward.1} parent=63 // pred_check
          %p1081 = pneg %p322
        $region70: #{policy_forward.1} parent=63 // pred_check_branch
          %1083 = sbr.rel (%p1081) target = $region72
        $region71: #{policy_forward.1} parent=63 // pred_region
          _
        $region72: #{policy_forward.1} parent=63 // pred_fallthru
          _
        // Predicated region
        $region73: #{policy_forward.1} parent=63 // pred_check
          %p1084 = pneg %p348
        $region74: #{policy_forward.1} parent=63 // pred_check_branch
          %1086 = sbr.rel (%p1084) target = $region76
        $region75: #{policy_forward.1} parent=63 // pred_region
          _
        $region76: #{policy_forward.1} parent=63 // pred_fallthru
          _
        // Predicated region
        $region77: #{policy_forward.1} parent=63 // pred_check
          %p1087 = pneg %p374
        $region78: #{policy_forward.1} parent=63 // pred_check_branch
          %1089 = sbr.rel (%p1087) target = $region80
        $region79: #{policy_forward.1} parent=63 // pred_region
          _
        $region80: #{policy_forward.1} parent=63 // pred_fallthru
          _
      $region64: #{policy_forward.1} parent=5 // pred_fallthru
        _
      %p1090 = scmp.le.s32.totalorder 2, %s23
      // Predicated region
      $region81: #{policy_forward.1} parent=5 // pred_check
        %p1091 = pneg %p1090
      $region82: #{policy_forward.1} parent=5 // pred_check_branch
        %1093 = sbr.rel (%p1091) target = $region84
      $region83: #{policy_forward.1} parent=5 // pred_region
        %s1094 = ssub.s32 %s23, 2
        // Predicated region
        $region85: #{policy_forward.1} parent=83 // pred_check
          %p1095 = pneg %p328
        $region86: #{policy_forward.1} parent=83 // pred_check_branch
          %1097 = sbr.rel (%p1095) target = $region88
        $region87: #{policy_forward.1} parent=83 // pred_region
          %p1098 = scmp.lt.s32.totalorder %s29, 1
          %s1099 = scalar_select %p1098, %s29, 1
          %s1100 = smul.addr %s1099, 8
          %s1101 = scalar_lea.vmem %s11, %s1100
        $region88: #{policy_forward.1} parent=83 // pred_fallthru
          _
        // Predicated region
        $region89: #{policy_forward.1} parent=83 // pred_check
          %p1102 = pneg %p354
        $region90: #{policy_forward.1} parent=83 // pred_check_branch
          %1104 = sbr.rel (%p1102) target = $region92
        $region91: #{policy_forward.1} parent=83 // pred_region
          %p1105 = scmp.lt.s32.totalorder %s29, 1
          %s1106 = scalar_select %p1105, %s29, 1
          %s1107 = smul.addr %s1106, 8
          %s1108 = scalar_lea.vmem %s12, %s1107
        $region92: #{policy_forward.1} parent=83 // pred_fallthru
          _
        // Predicated region
        $region93: #{policy_forward.1} parent=83 // pred_check
          %p1109 = pneg %p380
        $region94: #{policy_forward.1} parent=83 // pred_check_branch
          %1111 = sbr.rel (%p1109) target = $region96
        $region95: #{policy_forward.1} parent=83 // pred_region
          %p1112 = scmp.lt.s32.totalorder %s29, 1
          %s1113 = scalar_select %p1112, %s29, 1
          %s1114 = smul.addr %s1113, 8
          %s1115 = scalar_lea.vmem %s13, %s1114
        $region96: #{policy_forward.1} parent=83 // pred_fallthru
          _
      $region84: #{policy_forward.1} parent=5 // pred_fallthru
        _
    $region6: #{policy_forward.1} parent=1 // loop_footer
      %s27 = sadd.s32 1, %s23
    $region7: #{policy_forward.1} parent=1 // loop_footer_branch
      %22 = sbr.rel target = $region3
    $region8: #{policy_forward.1} parent=1 // loop_exit
      _
    %1116 = vsyncpa [#allocation3], 1
    %s1117 = scalar_lea.sflag [#allocation3], 1
    %1118 = vsyncpa %s1117, 1

</llo_original>
